<compile_context>
chip_gen: v5e
topology: v5e:2x2
jax: 0.10.0
libtpu: 0.0.40
codegen_flags: <defaults>
</compile_context>

<pallas_src>
import functools

import jax
import jax.numpy as jnp
from jax.experimental import pallas as pl
from jax.experimental.pallas import tpu as pltpu


def _round_up(x, m):
    return ((x + m - 1) // m) * m


# ---------------------------------------------------------------------------
# Fused kernel: for one (batch, spatial-tile) block, run the whole MLP stack.
#   refs layout: (x_ref, w1, b1, w2, b2, ..., wD, bD, o_ref)
#   x_ref : (C_in, TILE_M)      w_d : (Cout_d, Cin_d)      b_d : (Cout_d, 1)
#   o_ref : (C_out, TILE_M)
# ---------------------------------------------------------------------------
def _mlp_fused_kernel(*refs, depth):
    x_ref = refs[0]
    o_ref = refs[1 + 2 * depth]

    h = x_ref[...]                               # (Cin, TILE_M)
    for d in range(depth):
        w = refs[1 + 2 * d][...]                 # (Cout_d, Cin_d)
        b = refs[2 + 2 * d][...]                 # (Cout_d, 1)
        acc = jnp.dot(w, h, preferred_element_type=jnp.float32)
        acc = acc + b.astype(jnp.float32)        # broadcast over lanes
        if d < depth - 1:
            acc = jnp.maximum(acc, 0.0)          # ReLU on all but last layer
            h = acc.astype(w.dtype)              # matmul-input dtype (bf16/f32)
        else:
            o_ref[...] = acc.astype(o_ref.dtype)


# ---------------------------------------------------------------------------
# Parameter init (matches nn.Conv2d(k=1) with xavier_uniform_ weights, zero
# bias).  Weights are stored channels-first, (Cout, Cin), ready for W @ X.
# ---------------------------------------------------------------------------
def init_mlp_block_params(key, in_features, out_features, depth_of_mlp,
                          dtype=jnp.float32):
    params = []
    fan_in = in_features
    for _ in range(depth_of_mlp):
        key, sub = jax.random.split(key)
        # xavier_uniform_ on a (Cout, Cin, 1, 1) conv weight:
        # bound = sqrt(6 / (fan_in + fan_out)), fan_* = channels * 1 * 1
        bound = (6.0 / (fan_in + out_features)) ** 0.5
        w = jax.random.uniform(sub, (out_features, fan_in),
                               minval=-bound, maxval=bound, dtype=dtype)
        b = jnp.zeros((out_features, 1), dtype=dtype)
        params.append((w, b))
        fan_in = out_features
    return params


# ---------------------------------------------------------------------------
# Forward pass matching MlpBlock_Real.forward (input/output in NCHW),
# one fused pallas_call for the whole stack.
# ---------------------------------------------------------------------------
def mlp_block_real_forward(x_nchw, params, tile_m_cap=2048):
    N, C, H, W = x_nchw.shape
    hw = H * W
    depth = len(params)
    c_out = params[-1][0].shape[0]

    # NCHW -> (N, C, H*W) is a pure reshape (no transpose / extra HBM pass).
    x3 = x_nchw.reshape(N, C, hw)

    # Lane-dense row tile: multiple of 128, as large as reasonable.
    tile_m = min(tile_m_cap, _round_up(hw, 128))
    hw_pad = _round_up(hw, tile_m)
    if hw_pad != hw:
        x3 = jnp.pad(x3, ((0, 0), (0, 0), (0, hw_pad - hw)))

    # Build specs: x tile, then (w, b) per layer with constant index_maps.
    in_specs = [pl.BlockSpec((None, C, tile_m), lambda n, m: (n, 0, m))]
    args = [x3]
    for (w, b) in params:
        in_specs.append(pl.BlockSpec(w.shape, lambda n, m: (0, 0)))
        in_specs.append(pl.BlockSpec(b.shape, lambda n, m: (0, 0)))
        args.append(w)
        args.append(b)

    out3 = pl.pallas_call(
        functools.partial(_mlp_fused_kernel, depth=depth),
        out_shape=jax.ShapeDtypeStruct((N, c_out, hw_pad), x_nchw.dtype),
        grid=(N, hw_pad // tile_m),
        in_specs=in_specs,
        out_specs=pl.BlockSpec((None, c_out, tile_m), lambda n, m: (n, 0, m)),
        compiler_params=pltpu.CompilerParams(
            dimension_semantics=("parallel", "parallel")),
    )(*args)

    if hw_pad != hw:
        out3 = out3[:, :, :hw]
    return out3.reshape(N, c_out, H, W)


# ---------------------------------------------------------------------------
# Pure-JAX reference for correctness checks.
# ---------------------------------------------------------------------------
def _reference_forward(x_nchw, params):
    N, C, H, W = x_nchw.shape
    out = x_nchw.reshape(N, C, H * W)
    depth = len(params)
    for d, (w, b) in enumerate(params):
        out = jnp.einsum("oc,ncm->nom", w, out) + b[None, :, :]
        if d < depth - 1:
            out = jnp.maximum(out, 0.0)
    c_out = params[-1][0].shape[0]
    return out.reshape(N, c_out, H, W)


if __name__ == "__main__":
    # Shapes consistent with the module: batch=2, C_in=4, 16x16 spatial,
    # C_out=8, depth_of_mlp=3.  Grid = (2, 1) -> 2 steps (both v7x cores busy).
    N, C_in, H, W = 2, 4, 16, 16
    C_out, depth = 8, 3

    key = jax.random.PRNGKey(0)
    key_x, key_p = jax.random.split(key)

    x = jax.random.normal(key_x, (N, C_in, H, W), dtype=jnp.float32)
    params = init_mlp_block_params(key_p, C_in, C_out, depth)

    # --- f32 path (exact semantics of the PyTorch module) ---
    out = mlp_block_real_forward(x, params)
    out = jax.block_until_ready(out)
    ref = _reference_forward(x, params)
    assert out.shape == (N, C_out, H, W)
    assert jnp.allclose(out, ref, atol=1e-5, rtol=1e-5)

    # --- non-multiple-of-128 spatial size exercises the padded-tail path ---
    x_odd = jax.random.normal(key_x, (1, C_in, 10, 10), dtype=jnp.float32)
    out_odd = jax.block_until_ready(mlp_block_real_forward(x_odd, params))
    ref_odd = _reference_forward(x_odd, params)
    assert jnp.allclose(out_odd, ref_odd, atol=1e-5, rtol=1e-5)

    # --- bf16 storage / MXU inputs, f32 accumulation (memory-bound speedup) ---
    params_bf = [(w.astype(jnp.bfloat16), b.astype(jnp.bfloat16))
                 for (w, b) in params]
    out_bf = mlp_block_real_forward(x.astype(jnp.bfloat16), params_bf)
    out_bf = jax.block_until_ready(out_bf)
    assert jnp.allclose(out_bf.astype(jnp.float32), ref, atol=1e-1, rtol=1e-1)

    print("KERNEL_OK")
</pallas_src>

<mosaic_0001>
module attributes {stable_mosaic.version = 11 : i64} {
  func.func @_mlp_fused_kernel(%arg0: i32, %arg1: i32, %arg2: memref<1x4x256xf32, #tpu.memory_space<vmem>>, %arg3: memref<8x4xf32, #tpu.memory_space<vmem>>, %arg4: memref<8x1xf32, #tpu.memory_space<vmem>>, %arg5: memref<8x8xf32, #tpu.memory_space<vmem>>, %arg6: memref<8x1xf32, #tpu.memory_space<vmem>>, %arg7: memref<8x8xf32, #tpu.memory_space<vmem>>, %arg8: memref<8x1xf32, #tpu.memory_space<vmem>>, %arg9: memref<1x8x256xf32, #tpu.memory_space<vmem>>) attributes {dimension_semantics = [#tpu.dimension_semantics<parallel>, #tpu.dimension_semantics<parallel>], iteration_bounds = array<i64: 2, 1>, scalar_prefetch = 0 : i64, scratch_operands = 0 : i64, tpu.core_type = #tpu.core_type<tc>, window_params = [{transform_indices = @transform_0, window_bounds = array<i64: 1, 4, 256>}, {pipeline_mode = #tpu.pipeline_mode<synchronous>, transform_indices = @transform_1, window_bounds = array<i64: 8, 4>}, {pipeline_mode = #tpu.pipeline_mode<synchronous>, transform_indices = @transform_2, window_bounds = array<i64: 8, 1>}, {pipeline_mode = #tpu.pipeline_mode<synchronous>, transform_indices = @transform_3, window_bounds = array<i64: 8, 8>}, {pipeline_mode = #tpu.pipeline_mode<synchronous>, transform_indices = @transform_4, window_bounds = array<i64: 8, 1>}, {pipeline_mode = #tpu.pipeline_mode<synchronous>, transform_indices = @transform_5, window_bounds = array<i64: 8, 8>}, {pipeline_mode = #tpu.pipeline_mode<synchronous>, transform_indices = @transform_6, window_bounds = array<i64: 8, 1>}, {transform_indices = @transform_7, window_bounds = array<i64: 1, 8, 256>}]} {
    %c0 = arith.constant 0 : index
    %c0_0 = arith.constant 0 : index
    %c0_1 = arith.constant 0 : index
    %0 = vector.load %arg2[%c0, %c0_0, %c0_1] : memref<1x4x256xf32, #tpu.memory_space<vmem>>, vector<1x4x256xf32>
    %1 = vector.shape_cast %0 : vector<1x4x256xf32> to vector<4x256xf32>
    %c0_2 = arith.constant 0 : index
    %c0_3 = arith.constant 0 : index
    %2 = vector.load %arg3[%c0_2, %c0_3] : memref<8x4xf32, #tpu.memory_space<vmem>>, vector<8x4xf32>
    %c0_4 = arith.constant 0 : index
    %c0_5 = arith.constant 0 : index
    %3 = vector.load %arg4[%c0_4, %c0_5] : memref<8x1xf32, #tpu.memory_space<vmem>>, vector<8x1xf32>
    %cst = arith.constant dense<0.000000e+00> : vector<8x256xf32>
    %4 = tpu.matmul %2, %1, %cst {dimension_numbers = #tpu.dot_dimension_numbers<[1], [0], [0], [1], [0, 0, 1, 1], [], []>} : vector<8x4xf32>, vector<4x256xf32>, vector<8x256xf32> -> vector<8x256xf32>
    %5 = vector.broadcast %3 : vector<8x1xf32> to vector<8x256xf32>
    %6 = arith.addf %4, %5 : vector<8x256xf32>
    %cst_6 = arith.constant 0.000000e+00 : f32
    %7 = vector.broadcast %cst_6 : f32 to vector<8x256xf32>
    %8 = arith.maximumf %6, %7 : vector<8x256xf32>
    %c0_7 = arith.constant 0 : index
    %c0_8 = arith.constant 0 : index
    %9 = vector.load %arg5[%c0_7, %c0_8] : memref<8x8xf32, #tpu.memory_space<vmem>>, vector<8x8xf32>
    %c0_9 = arith.constant 0 : index
    %c0_10 = arith.constant 0 : index
    %10 = vector.load %arg6[%c0_9, %c0_10] : memref<8x1xf32, #tpu.memory_space<vmem>>, vector<8x1xf32>
    %cst_11 = arith.constant dense<0.000000e+00> : vector<8x256xf32>
    %11 = tpu.matmul %9, %8, %cst_11 {dimension_numbers = #tpu.dot_dimension_numbers<[1], [0], [0], [1], [0, 0, 1, 1], [], []>} : vector<8x8xf32>, vector<8x256xf32>, vector<8x256xf32> -> vector<8x256xf32>
    %12 = vector.broadcast %10 : vector<8x1xf32> to vector<8x256xf32>
    %13 = arith.addf %11, %12 : vector<8x256xf32>
    %cst_12 = arith.constant 0.000000e+00 : f32
    %14 = vector.broadcast %cst_12 : f32 to vector<8x256xf32>
    %15 = arith.maximumf %13, %14 : vector<8x256xf32>
    %c0_13 = arith.constant 0 : index
    %c0_14 = arith.constant 0 : index
    %16 = vector.load %arg7[%c0_13, %c0_14] : memref<8x8xf32, #tpu.memory_space<vmem>>, vector<8x8xf32>
    %c0_15 = arith.constant 0 : index
    %c0_16 = arith.constant 0 : index
    %17 = vector.load %arg8[%c0_15, %c0_16] : memref<8x1xf32, #tpu.memory_space<vmem>>, vector<8x1xf32>
    %cst_17 = arith.constant dense<0.000000e+00> : vector<8x256xf32>
    %18 = tpu.matmul %16, %15, %cst_17 {dimension_numbers = #tpu.dot_dimension_numbers<[1], [0], [0], [1], [0, 0, 1, 1], [], []>} : vector<8x8xf32>, vector<8x256xf32>, vector<8x256xf32> -> vector<8x256xf32>
    %19 = vector.broadcast %17 : vector<8x1xf32> to vector<8x256xf32>
    %20 = arith.addf %18, %19 : vector<8x256xf32>
    %c0_18 = arith.constant 0 : index
    %c0_19 = arith.constant 0 : index
    %c0_20 = arith.constant 0 : index
    %21 = vector.load %arg9[%c0_18, %c0_19, %c0_20] : memref<1x8x256xf32, #tpu.memory_space<vmem>>, vector<1x8x256xf32>
    %22 = vector.shape_cast %21 : vector<1x8x256xf32> to vector<8x256xf32>
    %23 = vector.shape_cast %20 : vector<8x256xf32> to vector<1x8x256xf32>
    tpu.vector_store %arg9[%c0_18, %c0_19, %c0_20], %23 {strides = array<i32>} : memref<1x8x256xf32, #tpu.memory_space<vmem>>, vector<1x8x256xf32>,
    return
  }
  func.func @transform_0(%arg0: i32, %arg1: i32) -> (i32, i32, i32) {
    %c0_i32 = arith.constant 0 : i32
    %c0_i32_0 = arith.constant 0 : i32
    return %arg0, %c0_i32, %arg1 : i32, i32, i32
  }
  func.func @transform_1(%arg0: i32, %arg1: i32) -> (i32, i32) {
    %c0_i32 = arith.constant 0 : i32
    %c0_i32_0 = arith.constant 0 : i32
    %c0_i32_1 = arith.constant 0 : i32
    return %c0_i32, %c0_i32_0 : i32, i32
  }
  func.func @transform_2(%arg0: i32, %arg1: i32) -> (i32, i32) {
    %c0_i32 = arith.constant 0 : i32
    %c0_i32_0 = arith.constant 0 : i32
    %c0_i32_1 = arith.constant 0 : i32
    return %c0_i32, %c0_i32_0 : i32, i32
  }
  func.func @transform_3(%arg0: i32, %arg1: i32) -> (i32, i32) {
    %c0_i32 = arith.constant 0 : i32
    %c0_i32_0 = arith.constant 0 : i32
    %c0_i32_1 = arith.constant 0 : i32
    return %c0_i32, %c0_i32_0 : i32, i32
  }
  func.func @transform_4(%arg0: i32, %arg1: i32) -> (i32, i32) {
    %c0_i32 = arith.constant 0 : i32
    %c0_i32_0 = arith.constant 0 : i32
    %c0_i32_1 = arith.constant 0 : i32
    return %c0_i32, %c0_i32_0 : i32, i32
  }
  func.func @transform_5(%arg0: i32, %arg1: i32) -> (i32, i32) {
    %c0_i32 = arith.constant 0 : i32
    %c0_i32_0 = arith.constant 0 : i32
    %c0_i32_1 = arith.constant 0 : i32
    return %c0_i32, %c0_i32_0 : i32, i32
  }
  func.func @transform_6(%arg0: i32, %arg1: i32) -> (i32, i32) {
    %c0_i32 = arith.constant 0 : i32
    %c0_i32_0 = arith.constant 0 : i32
    %c0_i32_1 = arith.constant 0 : i32
    return %c0_i32, %c0_i32_0 : i32, i32
  }
  func.func @transform_7(%arg0: i32, %arg1: i32) -> (i32, i32, i32) {
    %c0_i32 = arith.constant 0 : i32
    %c0_i32_0 = arith.constant 0 : i32
    return %arg0, %c0_i32, %arg1 : i32, i32, i32
  }
}

</mosaic_0001>

<llo_original>
// kernel: tpu_custom_call.1
$region0: #{tpu_custom_call.1}
  #allocation0 [shape = 'u32[]', space=smem, size = 0x4, offset = 0x4, fixed_abs, tag = 'smem constant byte address 0x4 - core index']
  #allocation1 [shape = 'u32[72,128]{1,0:T(1,128)}', space=vmem, size = 0x9000, scoped, tag = 'internal scratch']
  %s0 = inlined_call_operand.vmem [shape: f32[2,4,256], index: 0, kind: input, shape index: {}]
  %s1 = inlined_call_operand.vmem [shape: f32[8,4], index: 1, kind: input, shape index: {}]
  %s2 = inlined_call_operand.vmem [shape: f32[8,1], index: 2, kind: input, shape index: {}]
  %s3 = inlined_call_operand.vmem [shape: f32[8,8], index: 3, kind: input, shape index: {}]
  %s4 = inlined_call_operand.vmem [shape: f32[8,1], index: 4, kind: input, shape index: {}]
  %s5 = inlined_call_operand.vmem [shape: f32[8,8], index: 5, kind: input, shape index: {}]
  %s6 = inlined_call_operand.vmem [shape: f32[8,1], index: 6, kind: input, shape index: {}]
  %s7 = inlined_call_operand.hbm [shape: f32[2,8,256], index: 7, kind: output, shape index: {}]
  %s8 = sld [smem:[#allocation0]]
  $region61: #{tpu_custom_call.1} parent=0
    _
  %s10 = ssub.s32 1, %s8
  %s11 = scalar_select 0, %s10, %s8
  $region1: #{tpu_custom_call.1} parent=0
    #allocation2 [shape = 'u8[16384]{0}', space=vmem, size = 0x4000, scoped, tag = 'output window, operand 0']
    #allocation3 [shape = 's32[2]{0}', space=sflag, size = 0x8, scoped, tag = 'scoped memory for tpu_custom_call.1']
    %12 = vsyncpa [#allocation3], 0
    %s13 = scalar_lea.sflag [#allocation3], 1
    %14 = vsyncpa %s13, 0
    loop: start=0, step=1, limit=4
    $region2: #{tpu_custom_call.1} parent=1 // loop_pre_header
      _
    $region3: #{tpu_custom_call.1} parent=1 // loop_header
      %s16 = sphi 0, %s20
      %p17 = scmp.ge.s32.totalorder %s16, 4
      %s23 = sphi 0, %s35
      %s24 = sphi 0, %s31
      %s25 = sphi 0, %s23
      %s26 = sphi 0, %s24
      %s27 = sphi 0, %s25
      %s28 = sphi 0, %s26
      %s40 = sphi 0, %s42
      %s43 = sphi 0, %s40
      %s44 = sphi 0, %s43
      %s60 = sphi 0, %s44
      %s64 = sphi 0, %s64
      %s66 = sphi 0, %s64
      %s67 = sphi 0, %s66
      %s81 = sphi 0, %s67
      %s85 = sphi 0, %s85
      %s87 = sphi 0, %s85
      %s88 = sphi 0, %s87
      %s102 = sphi 0, %s88
      %s106 = sphi 0, %s106
      %s108 = sphi 0, %s106
      %s109 = sphi 0, %s108
      %s123 = sphi 0, %s109
      %s127 = sphi 0, %s127
      %s129 = sphi 0, %s127
      %s130 = sphi 0, %s129
      %s144 = sphi 0, %s130
      %s148 = sphi 0, %s148
      %s150 = sphi 0, %s148
      %s151 = sphi 0, %s150
      %s165 = sphi 0, %s151
      %s169 = sphi 0, %s169
      %s171 = sphi 0, %s169
      %s172 = sphi 0, %s171
      %s186 = sphi 0, %s172
      %s194 = sphi 0, %s196
      %s197 = sphi 0, %s194
      %s198 = sphi 0, %s197
      %s214 = sphi 0, %s198
    $region4: #{tpu_custom_call.1} parent=1 // loop_header_branch
      %19 = sbr.rel (%p17) target = $region8
    $region5: #{tpu_custom_call.1} parent=1 // loop_body
      %s21 = ssub.s32 %s16, 1
      %s22 = ssub.s32 %s16, 2
      %s29 = sadd.s32 1, %s24
      %p30 = scmp.ge.s32.totalorder %s29, 1
      %s31 = scalar_select %p30, 0, %s29
      %s32 = sadd.s32 1, %s23
      %s33 = scalar_select %p30, %s32, %s23
      %p34 = scmp.ge.s32.totalorder %s33, 2
      %s35 = scalar_select %p34, 0, %s33
      %s36 = ssub.s32 %s23, %s35
      %s37 = ssub.s32 %s24, %s31
      %s38 = sor.u32 %s36, %s37
      %p39 = scmp.eq.s32.totalorder %s38, 0
      %s41 = sadd.s32 %s40, 1
      %s42 = scalar_select %p39, %s40, %s41
      %p45 = pneg %p39
      %p46 = scmp.eq.s32.totalorder %s16, 1
      %p47 = por %p45, %p46
      %p48 = scmp.ne.s32.totalorder %s40, %s43
      %p49 = scmp.eq.s32.totalorder %s16, 0
      %p50 = por %p48, %p49
      %p51 = scmp.ne.s32.totalorder %s40, %s43
      %p52 = scmp.eq.s32.totalorder %s21, 1
      %p53 = por %p51, %p52
      %p54 = scmp.ne.s32.totalorder %s43, %s44
      %p55 = scmp.eq.s32.totalorder %s21, 0
      %p56 = por %p54, %p55
      %p57 = scmp.ne.s32.totalorder %s43, %s44
      %p58 = scmp.eq.s32.totalorder %s22, 1
      %p59 = por %p57, %p58
      %p61 = scmp.ne.s32.totalorder %s44, %s60
      %p62 = scmp.eq.s32.totalorder %s22, 0
      %p63 = por %p61, %p62
      %s65 = sadd.s32 %s64, 1
      %p68 = scmp.eq.s32.totalorder %s16, 1
      %p69 = scmp.ne.s32.totalorder %s64, %s66
      %p70 = scmp.eq.s32.totalorder %s16, 0
      %p71 = por %p69, %p70
      %p72 = scmp.ne.s32.totalorder %s64, %s66
      %p73 = scmp.eq.s32.totalorder %s21, 1
      %p74 = por %p72, %p73
      %p75 = scmp.ne.s32.totalorder %s66, %s67
      %p76 = scmp.eq.s32.totalorder %s21, 0
      %p77 = por %p75, %p76
      %p78 = scmp.ne.s32.totalorder %s66, %s67
      %p79 = scmp.eq.s32.totalorder %s22, 1
      %p80 = por %p78, %p79
      %p82 = scmp.ne.s32.totalorder %s67, %s81
      %p83 = scmp.eq.s32.totalorder %s22, 0
      %p84 = por %p82, %p83
      %s86 = sadd.s32 %s85, 1
      %p89 = scmp.eq.s32.totalorder %s16, 1
      %p90 = scmp.ne.s32.totalorder %s85, %s87
      %p91 = scmp.eq.s32.totalorder %s16, 0
      %p92 = por %p90, %p91
      %p93 = scmp.ne.s32.totalorder %s85, %s87
      %p94 = scmp.eq.s32.totalorder %s21, 1
      %p95 = por %p93, %p94
      %p96 = scmp.ne.s32.totalorder %s87, %s88
      %p97 = scmp.eq.s32.totalorder %s21, 0
      %p98 = por %p96, %p97
      %p99 = scmp.ne.s32.totalorder %s87, %s88
      %p100 = scmp.eq.s32.totalorder %s22, 1
      %p101 = por %p99, %p100
      %p103 = scmp.ne.s32.totalorder %s88, %s102
      %p104 = scmp.eq.s32.totalorder %s22, 0
      %p105 = por %p103, %p104
      %s107 = sadd.s32 %s106, 1
      %p110 = scmp.eq.s32.totalorder %s16, 1
      %p111 = scmp.ne.s32.totalorder %s106, %s108
      %p112 = scmp.eq.s32.totalorder %s16, 0
      %p113 = por %p111, %p112
      %p114 = scmp.ne.s32.totalorder %s106, %s108
      %p115 = scmp.eq.s32.totalorder %s21, 1
      %p116 = por %p114, %p115
      %p117 = scmp.ne.s32.totalorder %s108, %s109
      %p118 = scmp.eq.s32.totalorder %s21, 0
      %p119 = por %p117, %p118
      %p120 = scmp.ne.s32.totalorder %s108, %s109
      %p121 = scmp.eq.s32.totalorder %s22, 1
      %p122 = por %p120, %p121
      %p124 = scmp.ne.s32.totalorder %s109, %s123
      %p125 = scmp.eq.s32.totalorder %s22, 0
      %p126 = por %p124, %p125
      %s128 = sadd.s32 %s127, 1
      %p131 = scmp.eq.s32.totalorder %s16, 1
      %p132 = scmp.ne.s32.totalorder %s127, %s129
      %p133 = scmp.eq.s32.totalorder %s16, 0
      %p134 = por %p132, %p133
      %p135 = scmp.ne.s32.totalorder %s127, %s129
      %p136 = scmp.eq.s32.totalorder %s21, 1
      %p137 = por %p135, %p136
      %p138 = scmp.ne.s32.totalorder %s129, %s130
      %p139 = scmp.eq.s32.totalorder %s21, 0
      %p140 = por %p138, %p139
      %p141 = scmp.ne.s32.totalorder %s129, %s130
      %p142 = scmp.eq.s32.totalorder %s22, 1
      %p143 = por %p141, %p142
      %p145 = scmp.ne.s32.totalorder %s130, %s144
      %p146 = scmp.eq.s32.totalorder %s22, 0
      %p147 = por %p145, %p146
      %s149 = sadd.s32 %s148, 1
      %p152 = scmp.eq.s32.totalorder %s16, 1
      %p153 = scmp.ne.s32.totalorder %s148, %s150
      %p154 = scmp.eq.s32.totalorder %s16, 0
      %p155 = por %p153, %p154
      %p156 = scmp.ne.s32.totalorder %s148, %s150
      %p157 = scmp.eq.s32.totalorder %s21, 1
      %p158 = por %p156, %p157
      %p159 = scmp.ne.s32.totalorder %s150, %s151
      %p160 = scmp.eq.s32.totalorder %s21, 0
      %p161 = por %p159, %p160
      %p162 = scmp.ne.s32.totalorder %s150, %s151
      %p163 = scmp.eq.s32.totalorder %s22, 1
      %p164 = por %p162, %p163
      %p166 = scmp.ne.s32.totalorder %s151, %s165
      %p167 = scmp.eq.s32.totalorder %s22, 0
      %p168 = por %p166, %p167
      %s170 = sadd.s32 %s169, 1
      %p173 = scmp.eq.s32.totalorder %s16, 1
      %p174 = scmp.ne.s32.totalorder %s169, %s171
      %p175 = scmp.eq.s32.totalorder %s16, 0
      %p176 = por %p174, %p175
      %p177 = scmp.ne.s32.totalorder %s169, %s171
      %p178 = scmp.eq.s32.totalorder %s21, 1
      %p179 = por %p177, %p178
      %p180 = scmp.ne.s32.totalorder %s171, %s172
      %p181 = scmp.eq.s32.totalorder %s21, 0
      %p182 = por %p180, %p181
      %p183 = scmp.ne.s32.totalorder %s171, %s172
      %p184 = scmp.eq.s32.totalorder %s22, 1
      %p185 = por %p183, %p184
      %p187 = scmp.ne.s32.totalorder %s172, %s186
      %p188 = scmp.eq.s32.totalorder %s22, 0
      %p189 = por %p187, %p188
      %s190 = ssub.s32 %s23, %s35
      %s191 = ssub.s32 %s24, %s31
      %s192 = sor.u32 %s190, %s191
      %p193 = scmp.eq.s32.totalorder %s192, 0
      %s195 = sadd.s32 %s194, 1
      %s196 = scalar_select %p193, %s194, %s195
      %p199 = pneg %p193
      %p200 = scmp.eq.s32.totalorder %s16, 1
      %p201 = por %p199, %p200
      %p202 = scmp.ne.s32.totalorder %s194, %s197
      %p203 = scmp.eq.s32.totalorder %s16, 0
      %p204 = por %p202, %p203
      %p205 = scmp.ne.s32.totalorder %s194, %s197
      %p206 = scmp.eq.s32.totalorder %s21, 1
      %p207 = por %p205, %p206
      %p208 = scmp.ne.s32.totalorder %s197, %s198
      %p209 = scmp.eq.s32.totalorder %s21, 0
      %p210 = por %p208, %p209
      %p211 = scmp.ne.s32.totalorder %s197, %s198
      %p212 = scmp.eq.s32.totalorder %s22, 1
      %p213 = por %p211, %p212
      %p215 = scmp.ne.s32.totalorder %s198, %s214
      %p216 = scmp.eq.s32.totalorder %s22, 0
      %p217 = por %p215, %p216
      %p218 = scmp.le.s32.totalorder 1, %s16
      %p219 = scmp.lt.s32.totalorder %s16, 3
      %p220 = pnand %p218, %p219
      %p221 = pneg %p220
      // Predicated region
      $region9: #{tpu_custom_call.1} parent=5 // pred_check
        _
      $region10: #{tpu_custom_call.1} parent=5 // pred_check_branch
        %223 = sbr.rel (%p220) target = $region12
      $region11: #{tpu_custom_call.1} parent=5 // pred_region
        %s224 = ssub.s32 %s16, 1
        // Predicated region
        $region13: #{tpu_custom_call.1} parent=11 // pred_check
          %p225 = pneg %p77
        $region14: #{tpu_custom_call.1} parent=11 // pred_check_branch
          %227 = sbr.rel (%p225) target = $region16
        $region15: #{tpu_custom_call.1} parent=11 // pred_region
          _
        $region16: #{tpu_custom_call.1} parent=11 // pred_fallthru
          _
        // Predicated region
        $region17: #{tpu_custom_call.1} parent=11 // pred_check
          %p228 = pneg %p98
        $region18: #{tpu_custom_call.1} parent=11 // pred_check_branch
          %230 = sbr.rel (%p228) target = $region20
        $region19: #{tpu_custom_call.1} parent=11 // pred_region
          _
        $region20: #{tpu_custom_call.1} parent=11 // pred_fallthru
          _
        // Predicated region
        $region21: #{tpu_custom_call.1} parent=11 // pred_check
          %p231 = pneg %p119
        $region22: #{tpu_custom_call.1} parent=11 // pred_check_branch
          %233 = sbr.rel (%p231) target = $region24
        $region23: #{tpu_custom_call.1} parent=11 // pred_region
          _
        $region24: #{tpu_custom_call.1} parent=11 // pred_fallthru
          _
        // Predicated region
        $region25: #{tpu_custom_call.1} parent=11 // pred_check
          %p234 = pneg %p140
        $region26: #{tpu_custom_call.1} parent=11 // pred_check_branch
          %236 = sbr.rel (%p234) target = $region28
        $region27: #{tpu_custom_call.1} parent=11 // pred_region
          _
        $region28: #{tpu_custom_call.1} parent=11 // pred_fallthru
          _
        // Predicated region
        $region29: #{tpu_custom_call.1} parent=11 // pred_check
          %p237 = pneg %p161
        $region30: #{tpu_custom_call.1} parent=11 // pred_check_branch
          %239 = sbr.rel (%p237) target = $region32
        $region31: #{tpu_custom_call.1} parent=11 // pred_region
          _
        $region32: #{tpu_custom_call.1} parent=11 // pred_fallthru
          _
        // Predicated region
        $region33: #{tpu_custom_call.1} parent=11 // pred_check
          %p240 = pneg %p182
        $region34: #{tpu_custom_call.1} parent=11 // pred_check_branch
          %242 = sbr.rel (%p240) target = $region36
        $region35: #{tpu_custom_call.1} parent=11 // pred_region
          _
        $region36: #{tpu_custom_call.1} parent=11 // pred_fallthru
          _
      $region12: #{tpu_custom_call.1} parent=5 // pred_fallthru
        _
      %p243 = scmp.lt.s32.totalorder %s16, 2
      // Predicated region
      $region37: #{tpu_custom_call.1} parent=5 // pred_check
        %p244 = pneg %p243
      $region38: #{tpu_custom_call.1} parent=5 // pred_check_branch
        %246 = sbr.rel (%p244) target = $region40
      $region39: #{tpu_custom_call.1} parent=5 // pred_region
        // Predicated region
        $region41: #{tpu_custom_call.1} parent=39 // pred_check
          %p247 = pneg %p50
        $region42: #{tpu_custom_call.1} parent=39 // pred_check_branch
          %249 = sbr.rel (%p247) target = $region44
        $region43: #{tpu_custom_call.1} parent=39 // pred_region
          %s250 = smul.u32 2, %s24
          %p251 = scmp.lt.s32.totalorder %s23, 1
          %s252 = scalar_select %p251, %s23, 1
          %p253 = scmp.lt.s32.totalorder %s250, 1
          %s254 = scalar_select %p253, %s250, 1
          %s255 = smul.addr %s252, 2
          %s256 = sadd.s32 %s254, %s255
          %s257 = smul.addr %s256, 4
          %s258 = scalar_lea.vmem %s0, %s257
          %s259 = smul.u32 2, %s24
        $region44: #{tpu_custom_call.1} parent=39 // pred_fallthru
          _
      $region40: #{tpu_custom_call.1} parent=5 // pred_fallthru
        _
      %p260 = scmp.le.s32.totalorder 1, %s16
      %p261 = scmp.lt.s32.totalorder %s16, 3
      %p262 = pnand %p260, %p261
      %p263 = pneg %p262
      // Predicated region
      $region45: #{tpu_custom_call.1} parent=5 // pred_check
        _
      $region46: #{tpu_custom_call.1} parent=5 // pred_check_branch
        %265 = sbr.rel (%p262) target = $region48
      $region47: #{tpu_custom_call.1} parent=5 // pred_region
        %s266 = ssub.s32 %s16, 1
        %s267 = smul.u32 2, %s26
        %p268 = scmp.lt.s32.totalorder %s25, 1
        %s269 = scalar_select %p268, %s25, 1
        %p270 = scmp.lt.s32.totalorder %s267, 1
        %s271 = scalar_select %p270, %s267, 1
        %s272 = smul.addr %s269, 2
        %s273 = sadd.s32 %s271, %s272
        %s274 = smul.addr %s273, 4
        %s275 = scalar_lea.vmem %s0, %s274
        %p276 = pneg %p56
        %p277 = pneg %p53
        %p278 = pneg %p77
        %p279 = pneg %p74
        %p280 = pneg %p98
        %p281 = pneg %p95
        %p282 = pneg %p119
        %p283 = pneg %p116
        %p284 = pneg %p140
        %p285 = pneg %p137
        %p286 = pneg %p161
        %p287 = pneg %p158
        %p288 = pneg %p182
        %p289 = pneg %p179
        %p290 = pneg %p210
        %p291 = pneg %p207
        %s292 = sand.u32 %s197, 1
        %s293 = scalar_lea.sflag [#allocation3], %s292
        %s294 = sand.u32 %s197, 1
        %s295 = smul.addr %s294, 16
        %s296 = scalar_lea.vmem [#allocation2], %s295
        %s297 = smul.u32 2, %s26
        %p298 = scmp.lt.s32.totalorder %s25, 1
        %s299 = scalar_select %p298, %s25, 1
        %p300 = scmp.lt.s32.totalorder %s297, 1
        %s301 = scalar_select %p300, %s297, 1
        %s302 = smul.addr %s299, 2
        %s303 = sadd.s32 %s301, %s302
        %s304 = smul.addr %s303, 4
        %s305 = scalar_lea.vmem %s0, %s304
        %s306 = smul.u32 2, %s26
        %s307 = smul.u32 2, %s26
        %v308 = vld [vmem:[%s305] sm:$0xff]
        %v309 = vld [vmem:[%s1] sm:$0xff]
        %v310 = vld [vmem:[%s2] sm:$0xff]
        %312 = vset.pattern.permute.xlu0 0
        %313 = vperm.xlu0 %312, %v310
        %v314 = vpop.permute.xlu0 %313
        %317 = vst [vmem:[#allocation1] ss:$2 sm:$0xff] %v308
        %v318 = vld.sshfl [vmem:[#allocation1] sm:$0xff pattern:$0x75316420]
        %v319 = vld.sshfl [vmem:[#allocation1 + $0x8] sm:$0xff pattern:$0x75316420]
        %vm320 = vcmask 31744
        %v322 = vsel %vm320, %v309, 0
        %vm324 = vcmask 1043456
        %v325 = vsel %vm324, %v318, 0
        %v327 = vsel %vm324, %v319, 0
        %329 = vmatpush.msra.mxu0 0.0
        %330 = vmatpush.msra.mxu0 0.0
        %331 = vmatpush.msra.mxu0 0.0
        %332 = vmatpush.msra.mxu0 0.0
        %333 = vmatpush.msra.mxu0 0.0
        %334 = vmatpush.msra.mxu0 0.0
        %335 = vmatpush.msra.mxu0 0.0
        %336 = vmatpush.msra.mxu0 0.0
        %337 = vmatpush.msra.mxu0 0.0
        %338 = vmatpush.msra.mxu0 0.0
        %339 = vmatpush.msra.mxu0 0.0
        %340 = vmatpush.msra.mxu0 0.0
        %341 = vmatpush.msra.mxu0 0.0
        %342 = vmatpush.msra.mxu0 0.0
        %343 = vmatpush.msra.mxu0 0.0
        %344 = vmatpush.msra.mxu0 %v325
        %345 = vmatmul.f32.gmra.mxu0 %v322
        %v346 = vpop.f32.mrf.mxu0
        %v347 = vadd.f32 %v314, %v346
        %348 = vdwg.mxu0
        %349 = vmatpush.msra.mxu0 0.0
        %350 = vmatpush.msra.mxu0 0.0
        %351 = vmatpush.msra.mxu0 0.0
        %352 = vmatpush.msra.mxu0 0.0
        %353 = vmatpush.msra.mxu0 0.0
        %354 = vmatpush.msra.mxu0 0.0
        %355 = vmatpush.msra.mxu0 0.0
        %356 = vmatpush.msra.mxu0 0.0
        %357 = vmatpush.msra.mxu0 0.0
        %358 = vmatpush.msra.mxu0 0.0
        %359 = vmatpush.msra.mxu0 0.0
        %360 = vmatpush.msra.mxu0 0.0
        %361 = vmatpush.msra.mxu0 0.0
        %362 = vmatpush.msra.mxu0 0.0
        %363 = vmatpush.msra.mxu0 0.0
        %364 = vmatpush.msra.mxu0 %v327
        %365 = vmatmul.f32.gmra.mxu0 %v322
        %v366 = vpop.f32.mrf.mxu0
        %v367 = vadd.f32 %v314, %v366
        %368 = vdwg.mxu0
        %v369 = vmax.f32 %v347, 0.0
        %v370 = vmax.f32 %v367, 0.0
        %v371 = vld [vmem:[%s3] sm:$0xff]
        %v372 = vld [vmem:[%s4] sm:$0xff]
        %374 = vset.pattern.permute.xlu0 0
        %375 = vperm.xlu0 %374, %v372
        %v376 = vpop.permute.xlu0 %375
        %vm378 = vcmask 64512
        %v380 = vsel %vm378, %v371, 0
        %382 = vmatpush.msra.mxu0 0.0
        %383 = vmatpush.msra.mxu0 0.0
        %384 = vmatpush.msra.mxu0 0.0
        %385 = vmatpush.msra.mxu0 0.0
        %386 = vmatpush.msra.mxu0 0.0
        %387 = vmatpush.msra.mxu0 0.0
        %388 = vmatpush.msra.mxu0 0.0
        %389 = vmatpush.msra.mxu0 0.0
        %390 = vmatpush.msra.mxu0 0.0
        %391 = vmatpush.msra.mxu0 0.0
        %392 = vmatpush.msra.mxu0 0.0
        %393 = vmatpush.msra.mxu0 0.0
        %394 = vmatpush.msra.mxu0 0.0
        %395 = vmatpush.msra.mxu0 0.0
        %396 = vmatpush.msra.mxu0 0.0
        %397 = vmatpush.msra.mxu0 %v369
        %398 = vmatmul.f32.gmra.mxu0 %v380
        %v399 = vpop.f32.mrf.mxu0
        %v400 = vadd.f32 %v376, %v399
        %401 = vdwg.mxu0
        %402 = vmatpush.msra.mxu0 0.0
        %403 = vmatpush.msra.mxu0 0.0
        %404 = vmatpush.msra.mxu0 0.0
        %405 = vmatpush.msra.mxu0 0.0
        %406 = vmatpush.msra.mxu0 0.0
        %407 = vmatpush.msra.mxu0 0.0
        %408 = vmatpush.msra.mxu0 0.0
        %409 = vmatpush.msra.mxu0 0.0
        %410 = vmatpush.msra.mxu0 0.0
        %411 = vmatpush.msra.mxu0 0.0
        %412 = vmatpush.msra.mxu0 0.0
        %413 = vmatpush.msra.mxu0 0.0
        %414 = vmatpush.msra.mxu0 0.0
        %415 = vmatpush.msra.mxu0 0.0
        %416 = vmatpush.msra.mxu0 0.0
        %417 = vmatpush.msra.mxu0 %v370
        %418 = vmatmul.f32.gmra.mxu0 %v380
        %v419 = vpop.f32.mrf.mxu0
        %v420 = vadd.f32 %v376, %v419
        %421 = vdwg.mxu0
        %v422 = vmax.f32 %v400, 0.0
        %v423 = vmax.f32 %v420, 0.0
        %v424 = vld [vmem:[%s5] sm:$0xff]
        %v425 = vld [vmem:[%s6] sm:$0xff]
        %427 = vset.pattern.permute.xlu0 0
        %428 = vperm.xlu0 %427, %v425
        %v429 = vpop.permute.xlu0 %428
        %v432 = vsel %vm378, %v424, 0
        %434 = vmatpush.msra.mxu0 0.0
        %435 = vmatpush.msra.mxu0 0.0
        %436 = vmatpush.msra.mxu0 0.0
        %437 = vmatpush.msra.mxu0 0.0
        %438 = vmatpush.msra.mxu0 0.0
        %439 = vmatpush.msra.mxu0 0.0
        %440 = vmatpush.msra.mxu0 0.0
        %441 = vmatpush.msra.mxu0 0.0
        %442 = vmatpush.msra.mxu0 0.0
        %443 = vmatpush.msra.mxu0 0.0
        %444 = vmatpush.msra.mxu0 0.0
        %445 = vmatpush.msra.mxu0 0.0
        %446 = vmatpush.msra.mxu0 0.0
        %447 = vmatpush.msra.mxu0 0.0
        %448 = vmatpush.msra.mxu0 0.0
        %449 = vmatpush.msra.mxu0 %v422
        %450 = vmatmul.f32.gmra.mxu0 %v432
        %v451 = vpop.f32.mrf.mxu0
        %v452 = vadd.f32 %v429, %v451
        %453 = vdwg.mxu0
        %454 = vmatpush.msra.mxu0 0.0
        %455 = vmatpush.msra.mxu0 0.0
        %456 = vmatpush.msra.mxu0 0.0
        %457 = vmatpush.msra.mxu0 0.0
        %458 = vmatpush.msra.mxu0 0.0
        %459 = vmatpush.msra.mxu0 0.0
        %460 = vmatpush.msra.mxu0 0.0
        %461 = vmatpush.msra.mxu0 0.0
        %462 = vmatpush.msra.mxu0 0.0
        %463 = vmatpush.msra.mxu0 0.0
        %464 = vmatpush.msra.mxu0 0.0
        %465 = vmatpush.msra.mxu0 0.0
        %466 = vmatpush.msra.mxu0 0.0
        %467 = vmatpush.msra.mxu0 0.0
        %468 = vmatpush.msra.mxu0 0.0
        %469 = vmatpush.msra.mxu0 %v423
        %470 = vmatmul.f32.gmra.mxu0 %v432
        %v471 = vpop.f32.mrf.mxu0
        %v472 = vadd.f32 %v429, %v471
        %473 = vdwg.mxu0
        %474 = vst [vmem:[%s296] sm:$0xff] %v452
        %475 = vst [vmem:[%s296 + $0x8] sm:$0xff] %v472
        %s476 = sand.u32 %s197, 1
        %s477 = scalar_lea.sflag [#allocation3], %s476
        %s478 = sand.u32 %s197, 1
        %s479 = smul.addr %s478, 16
        %s480 = scalar_lea.vmem [#allocation2], %s479
        // Predicated region
        $region49: #{tpu_custom_call.1} parent=47 // pred_check
          %p481 = pneg %p207
        $region50: #{tpu_custom_call.1} parent=47 // pred_check_branch
          %483 = sbr.rel (%p481) target = $region52
        $region51: #{tpu_custom_call.1} parent=47 // pred_region
          %s484 = smul.u32 2, %s26
          %486 = vsyncadd %s477, 0
          %s487 = smul.addr %s25, 2
          %s488 = sadd.s32 %s484, %s487
          %s489 = smul.addr %s488, 8
          %s490 = scalar_lea.hbm %s7, %s489
          %s492 = sshll.u32 %s480, 4
          %s493 = int_to_ptr.vmem [resolvable:$true] %s492
          %s494 = sshll.u32 %s490, 4
          %s495 = int_to_ptr.hbm [resolvable:$true] %s494
          %497 = dma.vmem_to_hbm [thread:$0]  %s493, 256, %s495, %s477
        $region52: #{tpu_custom_call.1} parent=47 // pred_fallthru
          _
      $region48: #{tpu_custom_call.1} parent=5 // pred_fallthru
        _
      %p498 = scmp.le.s32.totalorder 2, %s16
      // Predicated region
      $region53: #{tpu_custom_call.1} parent=5 // pred_check
        %p499 = pneg %p498
      $region54: #{tpu_custom_call.1} parent=5 // pred_check_branch
        %501 = sbr.rel (%p499) target = $region56
      $region55: #{tpu_custom_call.1} parent=5 // pred_region
        %s502 = ssub.s32 %s16, 2
        // Predicated region
        $region57: #{tpu_custom_call.1} parent=55 // pred_check
          %p503 = pneg %p213
        $region58: #{tpu_custom_call.1} parent=55 // pred_check_branch
          %505 = sbr.rel (%p503) target = $region60
        $region59: #{tpu_custom_call.1} parent=55 // pred_region
          %s506 = sand.u32 %s198, 1
          %s507 = scalar_lea.sflag [#allocation3], %s506
          %s508 = sand.u32 %s198, 1
          %s509 = smul.addr %s508, 16
          %s510 = scalar_lea.vmem [#allocation2], %s509
          %512 = dma.done %s507, 256
        $region60: #{tpu_custom_call.1} parent=55 // pred_fallthru
          _
      $region56: #{tpu_custom_call.1} parent=5 // pred_fallthru
        _
    $region6: #{tpu_custom_call.1} parent=1 // loop_footer
      %s20 = sadd.s32 1, %s16
    $region7: #{tpu_custom_call.1} parent=1 // loop_footer_branch
      %15 = sbr.rel target = $region3
    $region8: #{tpu_custom_call.1} parent=1 // loop_exit
      _
    %513 = vsyncpa [#allocation3], 1
    %s514 = scalar_lea.sflag [#allocation3], 1
    %515 = vsyncpa %s514, 1

</llo_original>
